<compile_context>
chip_gen: v7x
topology: tpu7x:2x2x1
jax: 0.10.0
libtpu: 0.0.40
codegen_flags: <defaults>
</compile_context>

<pallas_src>
import functools
import math

import jax
import jax.numpy as jnp
from jax.experimental import pallas as pl
from jax.experimental.pallas import tpu as pltpu

EPS = 1e-5                      # PyTorch GroupNorm default eps
_SQRT_HALF = 0.7071067811865476
_GELU_TANH_C = 0.7978845608028654


def _round_up(x, m):
    return (x + m - 1) // m * m


def _cdiv(a, b):
    return -(-a // b)


# ----------------------------- kernels --------------------------------------


def _conv_stats_kernel(n_rows, padded, patch_ref, w1_ref, b1_ref,
                       y_ref, stats_ref):
    """Pass A: y = patches @ w1 + b1 (stored bf16) + per-tile sum / sum-sq of y."""
    tn = patch_ref.shape[0]
    y = jnp.dot(patch_ref[...], w1_ref[...],
                preferred_element_type=jnp.float32) + b1_ref[...]
    y_ref[...] = y.astype(jnp.bfloat16)
    if padded:  # zero-padded rows would contribute b1 to the stats, mask them
        row = (jax.lax.broadcasted_iota(jnp.int32, (tn, 1), 0)
               + pl.program_id(1) * tn)
        y = jnp.where(row < n_rows, y, 0.0)
    stats_ref[...] = jnp.concatenate(
        [jnp.sum(y, axis=0, keepdims=True),
         jnp.sum(y * y, axis=0, keepdims=True)], axis=0)


def _norm_gelu_rewrite_kernel(n_rows, padded, approx_gelu,
                              y_ref, sc1_ref, sh1_ref, w2_ref, b2_ref,
                              z_ref, stats_ref):
    """Pass B: folded norm1 -> GELU -> single fused rewrite matmul (store z bf16)
    -> per-tile norm2 statistics."""
    tn = y_ref.shape[0]
    y = y_ref[...].astype(jnp.float32) * sc1_ref[...] + sh1_ref[...]
    if approx_gelu:                               # tanh GELU -> EUP slot
        h = 0.5 * y * (1.0 + jnp.tanh(_GELU_TANH_C * (y + 0.044715 * y * y * y)))
    else:                                         # exact erf GELU (torch default)
        h = 0.5 * y * (1.0 + jax.lax.erf(y * _SQRT_HALF))
    # one 2*Cp-wide matmul ("a" half lanes [0,Cp), gate half [Cp,2Cp))
    z = jnp.dot(h.astype(jnp.bfloat16), w2_ref[...],
                preferred_element_type=jnp.float32) + b2_ref[...]
    z_ref[...] = z.astype(jnp.bfloat16)
    if padded:
        row = (jax.lax.broadcasted_iota(jnp.int32, (tn, 1), 0)
               + pl.program_id(1) * tn)
        z = jnp.where(row < n_rows, z, 0.0)
    stats_ref[...] = jnp.concatenate(
        [jnp.sum(z, axis=0, keepdims=True),
         jnp.sum(z * z, axis=0, keepdims=True)], axis=0)


def _norm_glu_kernel(cp, z_ref, sc2_ref, sh2_ref, out_ref):
    """Pass C: folded norm2 -> GLU.  Pure VPU/EUP, lane-aligned halves."""
    z = z_ref[...].astype(jnp.float32) * sc2_ref[...] + sh2_ref[...]
    out_ref[...] = z[:, :cp] * jax.nn.sigmoid(z[:, cp:])


# ----------------------------- wrapper ---------------------------------------


def _im2col_freq(x, K, S, P):
    """x: (B, chin, F, T) -> patches (B, Fout*T, chin*K) [chin-major], Fout.

    Static strided slices (no XLA gather); keeps the dtype of x."""
    B, chin, Fdim, T = x.shape
    xp = jnp.pad(x, ((0, 0), (0, 0), (P, P), (0, 0)))
    Fout = (Fdim + 2 * P - K) // S + 1
    cols = [xp[:, :, k:k + S * (Fout - 1) + 1:S, :] for k in range(K)]
    patches = jnp.stack(cols, axis=2)                   # (B, chin, K, Fout, T)
    patches = jnp.transpose(patches, (0, 3, 4, 1, 2))   # (B, Fout, T, chin, K)
    return patches.reshape(B, Fout * T, chin * K), Fout


def _vmem_capacity_bytes():
    try:
        return int(pltpu.get_tpu_info().vmem_capacity_bytes)
    except Exception:
        return 64 << 20      # conservative (v7x-sized) fallback


def henc_layer_forward(x, params, kernel_size=8, stride=4,
                       tile_rows=None, approx_gelu=True):
    """x: (B, chin, F, T) NCHW. Returns (B, chout, F//stride, T)."""
    B, chin, Fdim, T = x.shape
    K, S = kernel_size, stride
    P = (K - S) // 2
    chout = params["w1"].shape[1]

    # im2col in bf16 so every XLA-side intermediate of the largest tensor is half
    # size; the kernels consume bf16 patches anyway (numerically identical).
    # TODO(synk): fuse im2col into pass A to remove the K-fold HBM duplication.
    patches, Fout = _im2col_freq(x.astype(jnp.bfloat16), K, S, P)
    N = Fout * T
    CK = chin * K

    # Lane-dense padded channel layout.
    CKp = _round_up(CK, 128)
    Cp = _round_up(chout, 128)
    C2p = 2 * Cp

    # Generation-aware tiling / scoped-VMEM limits.
    vmem_cap = _vmem_capacity_bytes()
    big_vmem = vmem_cap >= (100 << 20)            # v5e / v6e (128 MiB)
    vmem_hi = (100 << 20) if big_vmem else (52 << 20)   # v7x: keep headroom
    if tile_rows is None:
        tile_rows = 2048 if big_vmem else 512

    TN = _round_up(min(int(tile_rows), _round_up(N, 16)), 16)

    def _worst_block_bytes(tn):
        a = tn * CKp * 2 + CKp * Cp * 2 + Cp * 4 + tn * Cp * 2 + 2 * Cp * 4
        b = (tn * Cp * 2 + 2 * Cp * 4 + Cp * C2p * 2 + C2p * 4
             + tn * C2p * 2 + 2 * C2p * 4)
        c = tn * C2p * 2 + 2 * C2p * 4 + tn * Cp * 4
        return max(a, b, c)

    # shrink TN until the double-buffered footprint fits under the ceiling
    while TN > 16 and 2 * _worst_block_bytes(TN) + (4 << 20) > vmem_hi:
        TN = max(16, _round_up(TN // 2, 16))

    Np = _round_up(N, TN)
    NT = Np // TN
    # keep both v7x TensorCores busy even at batch 1
    if B * NT < 2 and N > 16:
        TN = _round_up(_cdiv(N, 2), 16)
        Np = _round_up(N, TN)
        NT = Np // TN
    padded = Np != N

    patches = jnp.pad(patches, ((0, 0), (0, Np - N), (0, CKp - CK)))

    f32, bf16 = jnp.float32, jnp.bfloat16
    cpad = (0, Cp - chout)
    w1 = jnp.pad(params["w1"], ((0, CKp - CK), cpad)).astype(bf16)
    b1 = jnp.pad(params["b1"], ((0, 0), cpad)).astype(f32)
    g1 = jnp.pad(params["g1"], ((0, 0), cpad)).astype(f32)
    be1 = jnp.pad(params["be1"], ((0, 0), cpad)).astype(f32)

    def _split_pad_cols(a):  # (r, 2*chout) -> (r, 2*Cp): each GLU half 128-aligned
        return jnp.concatenate(
            [jnp.pad(a[:, :chout], ((0, 0), cpad)),
             jnp.pad(a[:, chout:], ((0, 0), cpad))], axis=1)

    w2 = jnp.pad(_split_pad_cols(params["w2"]),
                 ((0, Cp - chout), (0, 0))).astype(bf16)      # (Cp, 2*Cp) fused
    b2 = _split_pad_cols(params["b2"]).astype(f32)            # (1, 2*Cp)
    g2 = _split_pad_cols(params["g2"]).astype(f32)
    be2 = _split_pad_cols(params["be2"]).astype(f32)

    sem2 = ("parallel", "parallel")

    def _limit(block_bytes):
        return int(min(max(2 * block_bytes + (4 << 20), 16 << 20), vmem_hi))

    # ---------------- Pass A: conv -> y (bf16) + norm1 statistics ----------------
    bytes_a = TN * CKp * 2 + CKp * Cp * 2 + Cp * 4 + TN * Cp * 2 + 2 * Cp * 4
    y_buf, stats1 = pl.pallas_call(
        functools.partial(_conv_stats_kernel, N, padded),
        out_shape=(jax.ShapeDtypeStruct((B, Np, Cp), bf16),
                   jax.ShapeDtypeStruct((B, NT, 2, Cp), f32)),
        grid_spec=pltpu.PrefetchScalarGridSpec(
            num_scalar_prefetch=0,
            grid=(B, NT),
            in_specs=[
                pl.BlockSpec((None, TN, CKp), lambda b, t: (b, t, 0)),   # patches
                pl.BlockSpec((CKp, Cp), lambda b, t: (0, 0)),            # w1
                pl.BlockSpec((1, Cp), lambda b, t: (0, 0)),              # b1
            ],
            out_specs=[
                pl.BlockSpec((None, TN, Cp), lambda b, t: (b, t, 0)),
                pl.BlockSpec((None, None, 2, Cp), lambda b, t: (b, t, 0, 0)),
            ],
        ),
        compiler_params=pltpu.CompilerParams(
            dimension_semantics=sem2, vmem_limit_bytes=_limit(bytes_a)),
        cost_estimate=pl.CostEstimate(
            flops=2 * B * Np * CKp * Cp, transcendentals=0,
            bytes_accessed=int(B * Np * CKp * 2 + CKp * Cp * 2
                               + B * Np * Cp * 2 + B * NT * 2 * Cp * 4)),
    )(patches, w1, b1)

    # Fold GroupNorm(1, chout) into one per-channel scale/shift (b1 already in y).
    # NOTE: E[x^2]-E[x]^2 in f32; fine at these sizes (see review) — switch to
    # mean-shifted partial sums if very large inputs show drift.
    n1 = float(N * chout)
    mu1 = jnp.sum(stats1[:, :, 0, :], axis=(1, 2)) / n1
    var1 = jnp.maximum(jnp.sum(stats1[:, :, 1, :], axis=(1, 2)) / n1
                       - mu1 * mu1, 0.0)
    rstd1 = jax.lax.rsqrt(var1 + EPS)
    sc1 = g1 * rstd1[:, None]
    sh1 = be1 - mu1[:, None] * sc1
    sc1, sh1 = sc1[:, None, :], sh1[:, None, :]          # (B, 1, Cp)

    # ------- Pass B: norm1 -> GELU -> fused rewrite -> z (bf16) + norm2 stats -------
    bytes_b = (TN * Cp * 2 + 2 * Cp * 4 + Cp * C2p * 2 + C2p * 4
               + TN * C2p * 2 + 2 * C2p * 4)
    z_buf, stats2 = pl.pallas_call(
        functools.partial(_norm_gelu_rewrite_kernel, N, padded, approx_gelu),
        out_shape=(jax.ShapeDtypeStruct((B, Np, C2p), bf16),
                   jax.ShapeDtypeStruct((B, NT, 2, C2p), f32)),
        grid_spec=pltpu.PrefetchScalarGridSpec(
            num_scalar_prefetch=0,
            grid=(B, NT),
            in_specs=[
                pl.BlockSpec((None, TN, Cp), lambda b, t: (b, t, 0)),    # y
                pl.BlockSpec((None, 1, Cp), lambda b, t: (b, 0, 0)),     # scale1
                pl.BlockSpec((None, 1, Cp), lambda b, t: (b, 0, 0)),     # shift1
                pl.BlockSpec((Cp, C2p), lambda b, t: (0, 0)),            # w2 fused
                pl.BlockSpec((1, C2p), lambda b, t: (0, 0)),             # b2 fused
            ],
            out_specs=[
                pl.BlockSpec((None, TN, C2p), lambda b, t: (b, t, 0)),
                pl.BlockSpec((None, None, 2, C2p), lambda b, t: (b, t, 0, 0)),
            ],
        ),
        compiler_params=pltpu.CompilerParams(
            dimension_semantics=sem2, vmem_limit_bytes=_limit(bytes_b)),
        cost_estimate=pl.CostEstimate(
            flops=2 * B * Np * Cp * C2p,
            transcendentals=B * Np * Cp,
            bytes_accessed=int(B * Np * Cp * 2 + Cp * C2p * 2
                               + B * Np * C2p * 2 + B * NT * 2 * C2p * 4)),
    )(y_buf, sc1, sh1, w2, b2)

    n2 = float(N * 2 * chout)
    mu2 = jnp.sum(stats2[:, :, 0, :], axis=(1, 2)) / n2
    var2 = jnp.maximum(jnp.sum(stats2[:, :, 1, :], axis=(1, 2)) / n2
                       - mu2 * mu2, 0.0)
    rstd2 = jax.lax.rsqrt(var2 + EPS)
    sc2 = g2 * rstd2[:, None]                  # b2 already applied in pass B
    sh2 = be2 - mu2[:, None] * sc2
    sc2, sh2 = sc2[:, None, :], sh2[:, None, :]          # (B, 1, 2*Cp)

    # ---------------- Pass C: norm2 -> GLU (no matmuls) ----------------
    bytes_c = TN * C2p * 2 + 2 * C2p * 4 + TN * Cp * 4
    out = pl.pallas_call(
        functools.partial(_norm_glu_kernel, Cp),
        out_shape=jax.ShapeDtypeStruct((B, Np, Cp), f32),
        grid_spec=pltpu.PrefetchScalarGridSpec(
            num_scalar_prefetch=0,
            grid=(B, NT),
            in_specs=[
                pl.BlockSpec((None, TN, C2p), lambda b, t: (b, t, 0)),   # z
                pl.BlockSpec((None, 1, C2p), lambda b, t: (b, 0, 0)),    # sc2
                pl.BlockSpec((None, 1, C2p), lambda b, t: (b, 0, 0)),    # sh2
            ],
            out_specs=pl.BlockSpec((None, TN, Cp), lambda b, t: (b, t, 0)),
        ),
        compiler_params=pltpu.CompilerParams(
            dimension_semantics=sem2, vmem_limit_bytes=_limit(bytes_c)),
        cost_estimate=pl.CostEstimate(
            flops=6 * B * Np * C2p,
            transcendentals=B * Np * Cp,
            bytes_accessed=int(B * Np * C2p * 2 + B * Np * Cp * 4)),
    )(z_buf, sc2, sh2)

    out = out[:, :N, :chout].reshape(B, Fout, T, chout)
    # TODO(synk): consumers that accept channels-last bf16 could skip this
    #             slice+transpose and the f32 store entirely.
    return jnp.transpose(out, (0, 3, 1, 2))          # (B, chout, Fout, T)


# ----------------------------- reference -------------------------------------


def _ref_forward(x, params, kernel_size=8, stride=4):
    """Pure-JAX f32 reference mirroring the PyTorch forward semantics."""
    K, S = kernel_size, stride
    P = (K - S) // 2
    chout = params["w1"].shape[1]
    B, chin, Fdim, T = x.shape
    patches, Fout = _im2col_freq(x.astype(jnp.float32), K, S, P)

    y = patches @ params["w1"] + params["b1"]                        # conv
    mu = jnp.mean(y, axis=(1, 2), keepdims=True)
    var = jnp.mean((y - mu) ** 2, axis=(1, 2), keepdims=True)
    y = (y - mu) / jnp.sqrt(var + EPS) * params["g1"] + params["be1"]
    y = 0.5 * y * (1.0 + jax.lax.erf(y / math.sqrt(2.0)))            # exact gelu

    z = y @ params["w2"] + params["b2"]                              # rewrite 1x1
    mu2 = jnp.mean(z, axis=(1, 2), keepdims=True)
    var2 = jnp.mean((z - mu2) ** 2, axis=(1, 2), keepdims=True)
    z = (z - mu2) / jnp.sqrt(var2 + EPS) * params["g2"] + params["be2"]
    out = z[..., :chout] * jax.nn.sigmoid(z[..., chout:])            # GLU
    out = out.reshape(B, Fout, T, chout)
    return jnp.transpose(out, (0, 3, 1, 2))


def init_params(chin, chout, kernel_size=8, key=jax.random.PRNGKey(0)):
    K = kernel_size
    k1, k2, k3, k4, k5, k6, k7, k8 = jax.random.split(key, 8)
    fan1 = chin * K
    fan2 = chout
    return {
        # conv: torch weight (chout, chin, K, 1) -> (chin*K, chout)
        "w1": jax.random.uniform(k1, (chin * K, chout), jnp.float32, -1, 1) / math.sqrt(fan1),
        "b1": jax.random.uniform(k2, (1, chout), jnp.float32, -1, 1) / math.sqrt(fan1),
        "g1": 1.0 + 0.1 * jax.random.normal(k3, (1, chout), jnp.float32),
        "be1": 0.1 * jax.random.normal(k4, (1, chout), jnp.float32),
        # rewrite: torch weight (2*chout, chout, 1, 1) -> (chout, 2*chout)
        "w2": jax.random.uniform(k5, (chout, 2 * chout), jnp.float32, -1, 1) / math.sqrt(fan2),
        "b2": jax.random.uniform(k6, (1, 2 * chout), jnp.float32, -1, 1) / math.sqrt(fan2),
        "g2": 1.0 + 0.1 * jax.random.normal(k7, (1, 2 * chout), jnp.float32),
        "be2": 0.1 * jax.random.normal(k8, (1, 2 * chout), jnp.float32),
    }


if __name__ == "__main__":
    B, chin, chout = 2, 4, 8
    Fdim, T = 32, 8          # freq bins, time steps (NCHW: (B, chin, F, T))

    key = jax.random.PRNGKey(0)
    kx, kp = jax.random.split(key)
    x = jax.random.normal(kx, (B, chin, Fdim, T), jnp.float32)
    params = init_params(chin, chout, kernel_size=8, key=kp)

    out = jax.block_until_ready(henc_layer_forward(x, params))
    ref = jax.block_until_ready(_ref_forward(x, params))

    assert out.shape == (B, chout, Fdim // 4, T), out.shape
    max_err = float(jnp.max(jnp.abs(out - ref)))
    # Tolerance accounts for bf16 MXU matmuls + tanh-GELU vs. the all-f32 erf reference.
    assert jnp.allclose(out, ref, rtol=5e-2, atol=5e-2), max_err

    print("KERNEL_OK")
</pallas_src>

<mosaic_0001>
module attributes {stable_mosaic.version = 11 : i64} {
  func.func @_conv_stats_kernel(%arg0: i32, %arg1: i32, %arg2: memref<1x64x128xbf16, #tpu.memory_space<vmem>>, %arg3: memref<128x128xbf16, #tpu.memory_space<vmem>>, %arg4: memref<1x128xf32, #tpu.memory_space<vmem>>, %arg5: memref<1x64x128xbf16, #tpu.memory_space<vmem>>, %arg6: memref<1x1x2x128xf32, #tpu.memory_space<vmem>>) attributes {dimension_semantics = [#tpu.dimension_semantics<parallel>, #tpu.dimension_semantics<parallel>], iteration_bounds = array<i64: 2, 1>, scalar_prefetch = 0 : i64, scratch_operands = 0 : i64, tpu.core_type = #tpu.core_type<tc>, window_params = [{transform_indices = @transform_0, window_bounds = array<i64: 1, 64, 128>}, {pipeline_mode = #tpu.pipeline_mode<synchronous>, transform_indices = @transform_1, window_bounds = array<i64: 128, 128>}, {pipeline_mode = #tpu.pipeline_mode<synchronous>, transform_indices = @transform_2, window_bounds = array<i64: 1, 128>}, {transform_indices = @transform_3, window_bounds = array<i64: 1, 64, 128>}, {transform_indices = @transform_4, window_bounds = array<i64: 1, 1, 2, 128>}]} {
    %c0 = arith.constant 0 : index
    %c0_0 = arith.constant 0 : index
    %c0_1 = arith.constant 0 : index
    %0 = vector.load %arg2[%c0, %c0_0, %c0_1] : memref<1x64x128xbf16, #tpu.memory_space<vmem>>, vector<1x64x128xbf16>
    %1 = vector.shape_cast %0 : vector<1x64x128xbf16> to vector<64x128xbf16>
    %c0_2 = arith.constant 0 : index
    %c0_3 = arith.constant 0 : index
    %2 = vector.load %arg3[%c0_2, %c0_3] : memref<128x128xbf16, #tpu.memory_space<vmem>>, vector<128x128xbf16>
    %cst = arith.constant dense<0.000000e+00> : vector<64x128xf32>
    %3 = tpu.matmul %1, %2, %cst {dimension_numbers = #tpu.dot_dimension_numbers<[1], [0], [0], [1], [0, 0, 1, 1], [], []>} : vector<64x128xbf16>, vector<128x128xbf16>, vector<64x128xf32> -> vector<64x128xf32>
    %c0_4 = arith.constant 0 : index
    %c0_5 = arith.constant 0 : index
    %4 = vector.load %arg4[%c0_4, %c0_5] : memref<1x128xf32, #tpu.memory_space<vmem>>, vector<1x128xf32>
    %5 = vector.broadcast %4 : vector<1x128xf32> to vector<64x128xf32>
    %6 = arith.addf %3, %5 : vector<64x128xf32>
    %7 = arith.truncf %6 : vector<64x128xf32> to vector<64x128xbf16>
    %c0_6 = arith.constant 0 : index
    %c0_7 = arith.constant 0 : index
    %c0_8 = arith.constant 0 : index
    %8 = vector.load %arg5[%c0_6, %c0_7, %c0_8] : memref<1x64x128xbf16, #tpu.memory_space<vmem>>, vector<1x64x128xbf16>
    %9 = vector.shape_cast %8 : vector<1x64x128xbf16> to vector<64x128xbf16>
    %10 = vector.shape_cast %7 : vector<64x128xbf16> to vector<1x64x128xbf16>
    tpu.vector_store %arg5[%c0_6, %c0_7, %c0_8], %10 {strides = array<i32>} : memref<1x64x128xbf16, #tpu.memory_space<vmem>>, vector<1x64x128xbf16>,
    %cst_9 = arith.constant dense<0.000000e+00> : vector<128xf32>
    %11 = vector.multi_reduction <add>, %6, %cst_9 [0] : vector<64x128xf32> to vector<128xf32>
    %12 = vector.shape_cast %11 : vector<128xf32> to vector<1x128xf32>
    %13 = arith.mulf %6, %6 : vector<64x128xf32>
    %cst_10 = arith.constant dense<0.000000e+00> : vector<128xf32>
    %14 = vector.multi_reduction <add>, %13, %cst_10 [0] : vector<64x128xf32> to vector<128xf32>
    %15 = vector.shape_cast %14 : vector<128xf32> to vector<1x128xf32>
    %16 = tpu.concatenate %12, %15 in 0 : vector<1x128xf32>, vector<1x128xf32> -> vector<2x128xf32>
    %c0_11 = arith.constant 0 : index
    %c0_12 = arith.constant 0 : index
    %c0_13 = arith.constant 0 : index
    %c0_14 = arith.constant 0 : index
    %17 = vector.load %arg6[%c0_11, %c0_12, %c0_13, %c0_14] : memref<1x1x2x128xf32, #tpu.memory_space<vmem>>, vector<1x1x2x128xf32>
    %18 = vector.shape_cast %17 : vector<1x1x2x128xf32> to vector<2x128xf32>
    %19 = vector.shape_cast %16 : vector<2x128xf32> to vector<1x1x2x128xf32>
    tpu.vector_store %arg6[%c0_11, %c0_12, %c0_13, %c0_14], %19 {strides = array<i32>} : memref<1x1x2x128xf32, #tpu.memory_space<vmem>>, vector<1x1x2x128xf32>,
    return
  }
  func.func @transform_0(%arg0: i32, %arg1: i32) -> (i32, i32, i32) {
    %c0_i32 = arith.constant 0 : i32
    %c0_i32_0 = arith.constant 0 : i32
    return %arg0, %arg1, %c0_i32 : i32, i32, i32
  }
  func.func @transform_1(%arg0: i32, %arg1: i32) -> (i32, i32) {
    %c0_i32 = arith.constant 0 : i32
    %c0_i32_0 = arith.constant 0 : i32
    %c0_i32_1 = arith.constant 0 : i32
    return %c0_i32, %c0_i32_0 : i32, i32
  }
  func.func @transform_2(%arg0: i32, %arg1: i32) -> (i32, i32) {
    %c0_i32 = arith.constant 0 : i32
    %c0_i32_0 = arith.constant 0 : i32
    %c0_i32_1 = arith.constant 0 : i32
    return %c0_i32, %c0_i32_0 : i32, i32
  }
  func.func @transform_3(%arg0: i32, %arg1: i32) -> (i32, i32, i32) {
    %c0_i32 = arith.constant 0 : i32
    %c0_i32_0 = arith.constant 0 : i32
    return %arg0, %arg1, %c0_i32 : i32, i32, i32
  }
  func.func @transform_4(%arg0: i32, %arg1: i32) -> (i32, i32, i32, i32) {
    %c0_i32 = arith.constant 0 : i32
    %c0_i32_0 = arith.constant 0 : i32
    %c0_i32_1 = arith.constant 0 : i32
    return %arg0, %arg1, %c0_i32, %c0_i32_0 : i32, i32, i32, i32
  }
}

</mosaic_0001>

<llo_original>
// kernel: tpu_custom_call.1
$region0: #{tpu_custom_call.1}
  #allocation0 [shape = 'u32[]', space=smem, size = 0x4, offset = 0x4, fixed_abs, tag = 'smem constant byte address 0x4 - core index']
  #allocation1 [shape = 'u32[144,128]{1,0:T(1,128)}', space=vmem, size = 0x12000, scoped, tag = 'internal scratch']
  %s0 = inlined_call_operand.hbm [shape: bf16[2,64,128], index: 0, kind: input, shape index: {}]
  %s1 = inlined_call_operand.hbm [shape: bf16[128,128], index: 1, kind: input, shape index: {}]
  %s2 = inlined_call_operand.vmem [shape: f32[1,128], index: 2, kind: input, shape index: {}]
  %s3 = inlined_call_operand.hbm [shape: bf16[2,64,128], index: 3, kind: output, shape index: {0}]
  %s4 = inlined_call_operand.hbm [shape: f32[2,1,2,128], index: 4, kind: output, shape index: {1}]
  %5 = xla_tuple %s3, %s4
  %s6 = sld [smem:[#allocation0]]
  $region61: #{tpu_custom_call.1} parent=0
    _
  %s8 = ssub.s32 1, %s6
  %s9 = scalar_select 0, %s8, %s6
  $region1: #{tpu_custom_call.1} parent=0
    #allocation2 [shape = 'u8[32768]{0}', space=vmem, size = 0x8000, scoped, tag = 'input window, operand 0']
    #allocation3 [shape = 's32[2]{0}', space=sflag, size = 0x8, scoped, tag = 'scoped memory for tpu_custom_call.1']
    #allocation4 [shape = 's32[2]{0}', space=sflag, size = 0x8, scoped, tag = 'scoped memory for tpu_custom_call.1']
    #allocation5 [shape = 'u8[32768]{0}', space=vmem, size = 0x8000, scoped, tag = 'input window, operand 1, single buffered']
    #allocation6 [shape = 's32[1]{0}', space=sflag, size = 0x4, scoped, tag = 'scoped memory for tpu_custom_call.1']
    #allocation7 [shape = 'u8[32768]{0}', space=vmem, size = 0x8000, scoped, tag = 'output window, operand 0']
    #allocation8 [shape = 'u8[2048]{0}', space=vmem, size = 0x800, scoped, tag = 'output window, operand 1']
    #allocation9 [shape = 's32[2]{0}', space=sflag, size = 0x8, scoped, tag = 'scoped memory for tpu_custom_call.1']
    %10 = vsyncpa [#allocation3], 0
    %s11 = scalar_lea.sflag [#allocation3], 1
    %12 = vsyncpa %s11, 0
    %13 = vsyncpa [#allocation6], 0
    %14 = vsyncpa [#allocation4], 0
    %s15 = scalar_lea.sflag [#allocation4], 1
    %16 = vsyncpa %s15, 0
    %17 = vsyncpa [#allocation9], 0
    %s18 = scalar_lea.sflag [#allocation9], 1
    %19 = vsyncpa %s18, 0
    loop: start=0, step=1, limit=4
    $region2: #{tpu_custom_call.1} parent=1 // loop_pre_header
      _
    $region3: #{tpu_custom_call.1} parent=1 // loop_header
      %s21 = sphi 0, %s25
      %p22 = scmp.ge.s32.totalorder %s21, 4
      %s28 = sphi 0, %s40
      %s29 = sphi 0, %s36
      %s30 = sphi 0, %s28
      %s31 = sphi 0, %s29
      %s32 = sphi 0, %s30
      %s33 = sphi 0, %s31
      %s45 = sphi 0, %s47
      %s48 = sphi 0, %s45
      %s49 = sphi 0, %s48
      %s65 = sphi 0, %s49
      %s69 = sphi 0, %s69
      %s71 = sphi 0, %s69
      %s72 = sphi 0, %s71
      %s86 = sphi 0, %s72
      %s90 = sphi 0, %s90
      %s92 = sphi 0, %s90
      %s93 = sphi 0, %s92
      %s107 = sphi 0, %s93
      %s115 = sphi 0, %s117
      %s118 = sphi 0, %s115
      %s119 = sphi 0, %s118
      %s135 = sphi 0, %s119
      %s143 = sphi 0, %s145
      %s146 = sphi 0, %s143
      %s147 = sphi 0, %s146
      %s163 = sphi 0, %s147
    $region4: #{tpu_custom_call.1} parent=1 // loop_header_branch
      %24 = sbr.rel (%p22) target = $region8
    $region5: #{tpu_custom_call.1} parent=1 // loop_body
      %s26 = ssub.s32 %s21, 1
      %s27 = ssub.s32 %s21, 2
      %s34 = sadd.s32 1, %s29
      %p35 = scmp.ge.s32.totalorder %s34, 1
      %s36 = scalar_select %p35, 0, %s34
      %s37 = sadd.s32 1, %s28
      %s38 = scalar_select %p35, %s37, %s28
      %p39 = scmp.ge.s32.totalorder %s38, 2
      %s40 = scalar_select %p39, 0, %s38
      %s41 = ssub.s32 %s28, %s40
      %s42 = ssub.s32 %s29, %s36
      %s43 = sor.u32 %s41, %s42
      %p44 = scmp.eq.s32.totalorder %s43, 0
      %s46 = sadd.s32 %s45, 1
      %s47 = scalar_select %p44, %s45, %s46
      %p50 = pneg %p44
      %p51 = scmp.eq.s32.totalorder %s21, 1
      %p52 = por %p50, %p51
      %p53 = scmp.ne.s32.totalorder %s45, %s48
      %p54 = scmp.eq.s32.totalorder %s21, 0
      %p55 = por %p53, %p54
      %p56 = scmp.ne.s32.totalorder %s45, %s48
      %p57 = scmp.eq.s32.totalorder %s26, 1
      %p58 = por %p56, %p57
      %p59 = scmp.ne.s32.totalorder %s48, %s49
      %p60 = scmp.eq.s32.totalorder %s26, 0
      %p61 = por %p59, %p60
      %p62 = scmp.ne.s32.totalorder %s48, %s49
      %p63 = scmp.eq.s32.totalorder %s27, 1
      %p64 = por %p62, %p63
      %p66 = scmp.ne.s32.totalorder %s49, %s65
      %p67 = scmp.eq.s32.totalorder %s27, 0
      %p68 = por %p66, %p67
      %s70 = sadd.s32 %s69, 1
      %p73 = scmp.eq.s32.totalorder %s21, 1
      %p74 = scmp.ne.s32.totalorder %s69, %s71
      %p75 = scmp.eq.s32.totalorder %s21, 0
      %p76 = por %p74, %p75
      %p77 = scmp.ne.s32.totalorder %s69, %s71
      %p78 = scmp.eq.s32.totalorder %s26, 1
      %p79 = por %p77, %p78
      %p80 = scmp.ne.s32.totalorder %s71, %s72
      %p81 = scmp.eq.s32.totalorder %s26, 0
      %p82 = por %p80, %p81
      %p83 = scmp.ne.s32.totalorder %s71, %s72
      %p84 = scmp.eq.s32.totalorder %s27, 1
      %p85 = por %p83, %p84
      %p87 = scmp.ne.s32.totalorder %s72, %s86
      %p88 = scmp.eq.s32.totalorder %s27, 0
      %p89 = por %p87, %p88
      %s91 = sadd.s32 %s90, 1
      %p94 = scmp.eq.s32.totalorder %s21, 1
      %p95 = scmp.ne.s32.totalorder %s90, %s92
      %p96 = scmp.eq.s32.totalorder %s21, 0
      %p97 = por %p95, %p96
      %p98 = scmp.ne.s32.totalorder %s90, %s92
      %p99 = scmp.eq.s32.totalorder %s26, 1
      %p100 = por %p98, %p99
      %p101 = scmp.ne.s32.totalorder %s92, %s93
      %p102 = scmp.eq.s32.totalorder %s26, 0
      %p103 = por %p101, %p102
      %p104 = scmp.ne.s32.totalorder %s92, %s93
      %p105 = scmp.eq.s32.totalorder %s27, 1
      %p106 = por %p104, %p105
      %p108 = scmp.ne.s32.totalorder %s93, %s107
      %p109 = scmp.eq.s32.totalorder %s27, 0
      %p110 = por %p108, %p109
      %s111 = ssub.s32 %s28, %s40
      %s112 = ssub.s32 %s29, %s36
      %s113 = sor.u32 %s111, %s112
      %p114 = scmp.eq.s32.totalorder %s113, 0
      %s116 = sadd.s32 %s115, 1
      %s117 = scalar_select %p114, %s115, %s116
      %p120 = pneg %p114
      %p121 = scmp.eq.s32.totalorder %s21, 1
      %p122 = por %p120, %p121
      %p123 = scmp.ne.s32.totalorder %s115, %s118
      %p124 = scmp.eq.s32.totalorder %s21, 0
      %p125 = por %p123, %p124
      %p126 = scmp.ne.s32.totalorder %s115, %s118
      %p127 = scmp.eq.s32.totalorder %s26, 1
      %p128 = por %p126, %p127
      %p129 = scmp.ne.s32.totalorder %s118, %s119
      %p130 = scmp.eq.s32.totalorder %s26, 0
      %p131 = por %p129, %p130
      %p132 = scmp.ne.s32.totalorder %s118, %s119
      %p133 = scmp.eq.s32.totalorder %s27, 1
      %p134 = por %p132, %p133
      %p136 = scmp.ne.s32.totalorder %s119, %s135
      %p137 = scmp.eq.s32.totalorder %s27, 0
      %p138 = por %p136, %p137
      %s139 = ssub.s32 %s28, %s40
      %s140 = ssub.s32 %s29, %s36
      %s141 = sor.u32 %s139, %s140
      %p142 = scmp.eq.s32.totalorder %s141, 0
      %s144 = sadd.s32 %s143, 1
      %s145 = scalar_select %p142, %s143, %s144
      %p148 = pneg %p142
      %p149 = scmp.eq.s32.totalorder %s21, 1
      %p150 = por %p148, %p149
      %p151 = scmp.ne.s32.totalorder %s143, %s146
      %p152 = scmp.eq.s32.totalorder %s21, 0
      %p153 = por %p151, %p152
      %p154 = scmp.ne.s32.totalorder %s143, %s146
      %p155 = scmp.eq.s32.totalorder %s26, 1
      %p156 = por %p154, %p155
      %p157 = scmp.ne.s32.totalorder %s146, %s147
      %p158 = scmp.eq.s32.totalorder %s26, 0
      %p159 = por %p157, %p158
      %p160 = scmp.ne.s32.totalorder %s146, %s147
      %p161 = scmp.eq.s32.totalorder %s27, 1
      %p162 = por %p160, %p161
      %p164 = scmp.ne.s32.totalorder %s147, %s163
      %p165 = scmp.eq.s32.totalorder %s27, 0
      %p166 = por %p164, %p165
      %p167 = scmp.le.s32.totalorder 1, %s21
      %p168 = scmp.lt.s32.totalorder %s21, 3
      %p169 = pnand %p167, %p168
      %p170 = pneg %p169
      // Predicated region
      $region9: #{tpu_custom_call.1} parent=5 // pred_check
        _
      $region10: #{tpu_custom_call.1} parent=5 // pred_check_branch
        %172 = sbr.rel (%p169) target = $region12
      $region11: #{tpu_custom_call.1} parent=5 // pred_region
        %s173 = ssub.s32 %s21, 1
        // Predicated region
        $region13: #{tpu_custom_call.1} parent=11 // pred_check
          %p174 = pneg %p82
        $region14: #{tpu_custom_call.1} parent=11 // pred_check_branch
          %176 = sbr.rel (%p174) target = $region16
        $region15: #{tpu_custom_call.1} parent=11 // pred_region
          %s178 = ssub.s32 1024, 1024
          %179 = vsyncadd [#allocation6], %s178
          %s180 = sshll.u32 [#allocation5], 4
          %s181 = int_to_ptr.vmem [resolvable:$true] %s180
          %186 = dma.hbm_to_vmem [thread:$0]  %s1, 1024, %s181, [#allocation6], 64, 64, 4
        $region16: #{tpu_custom_call.1} parent=11 // pred_fallthru
          _
        // Predicated region
        $region17: #{tpu_custom_call.1} parent=11 // pred_check
          %p187 = pneg %p103
        $region18: #{tpu_custom_call.1} parent=11 // pred_check_branch
          %189 = sbr.rel (%p187) target = $region20
        $region19: #{tpu_custom_call.1} parent=11 // pred_region
          _
        $region20: #{tpu_custom_call.1} parent=11 // pred_fallthru
          _
      $region12: #{tpu_custom_call.1} parent=5 // pred_fallthru
        _
      %p190 = scmp.lt.s32.totalorder %s21, 2
      // Predicated region
      $region21: #{tpu_custom_call.1} parent=5 // pred_check
        %p191 = pneg %p190
      $region22: #{tpu_custom_call.1} parent=5 // pred_check_branch
        %193 = sbr.rel (%p191) target = $region24
      $region23: #{tpu_custom_call.1} parent=5 // pred_region
        // Predicated region
        $region25: #{tpu_custom_call.1} parent=23 // pred_check
          %p194 = pneg %p55
        $region26: #{tpu_custom_call.1} parent=23 // pred_check_branch
          %196 = sbr.rel (%p194) target = $region28
        $region27: #{tpu_custom_call.1} parent=23 // pred_region
          %s197 = sand.u32 %s45, 1
          %s198 = scalar_lea.sflag [#allocation3], %s197
          %s199 = sand.u32 %s45, 1
          %s200 = smul.addr %s199, 32
          %s201 = scalar_lea.vmem [#allocation2], %s200
          %s202 = smul.u32 8, %s29
          %s204 = ssub.s32 512, 512
          %205 = vsyncadd %s198, %s204
          %s206 = smul.addr %s28, 8
          %s207 = sadd.s32 %s202, %s206
          %s208 = smul.addr %s207, 64
          %s209 = scalar_lea.hbm %s0, %s208
          %s210 = sshll.u32 %s201, 4
          %s211 = int_to_ptr.vmem [resolvable:$true] %s210
          %216 = dma.hbm_to_vmem [thread:$0]  %s209, 512, %s211, %s198, 64, 64, 4
        $region28: #{tpu_custom_call.1} parent=23 // pred_fallthru
          _
      $region24: #{tpu_custom_call.1} parent=5 // pred_fallthru
        _
      %p217 = scmp.le.s32.totalorder 1, %s21
      %p218 = scmp.lt.s32.totalorder %s21, 3
      %p219 = pnand %p217, %p218
      %p220 = pneg %p219
      // Predicated region
      $region29: #{tpu_custom_call.1} parent=5 // pred_check
        _
      $region30: #{tpu_custom_call.1} parent=5 // pred_check_branch
        %222 = sbr.rel (%p219) target = $region32
      $region31: #{tpu_custom_call.1} parent=5 // pred_region
        %s223 = ssub.s32 %s21, 1
        %s224 = sand.u32 %s48, 1
        %s225 = scalar_lea.sflag [#allocation3], %s224
        %s226 = sand.u32 %s48, 1
        %s227 = smul.addr %s226, 32
        %s228 = scalar_lea.vmem [#allocation2], %s227
        // Predicated region
        $region33: #{tpu_custom_call.1} parent=31 // pred_check
          %p229 = pneg %p61
        $region34: #{tpu_custom_call.1} parent=31 // pred_check_branch
          %231 = sbr.rel (%p229) target = $region36
        $region35: #{tpu_custom_call.1} parent=31 // pred_region
          %232 = dma.done %s225, 512
        $region36: #{tpu_custom_call.1} parent=31 // pred_fallthru
          _
        // Predicated region
        $region37: #{tpu_custom_call.1} parent=31 // pred_check
          %p233 = pneg %p82
        $region38: #{tpu_custom_call.1} parent=31 // pred_check_branch
          %235 = sbr.rel (%p233) target = $region40
        $region39: #{tpu_custom_call.1} parent=31 // pred_region
          %236 = dma.done [#allocation6], 1024
        $region40: #{tpu_custom_call.1} parent=31 // pred_fallthru
          _
        %s237 = sand.u32 %s48, 1
        %s238 = scalar_lea.sflag [#allocation3], %s237
        %s239 = sand.u32 %s48, 1
        %s240 = smul.addr %s239, 32
        %s241 = scalar_lea.vmem [#allocation2], %s240
        %p242 = pneg %p61
        %p243 = pneg %p58
        %p244 = pneg %p82
        %p245 = pneg %p79
        %p246 = pneg %p103
        %p247 = pneg %p100
        %p248 = pneg %p131
        %p249 = pneg %p128
        %s250 = sand.u32 %s118, 1
        %s251 = scalar_lea.sflag [#allocation4], %s250
        %s252 = sand.u32 %s118, 1
        %s253 = smul.addr %s252, 32
        %s254 = scalar_lea.vmem [#allocation7], %s253
        %p255 = pneg %p159
        %p256 = pneg %p156
        %s257 = sand.u32 %s146, 1
        %s258 = scalar_lea.sflag [#allocation9], %s257
        %s259 = sand.u32 %s146, 1
        %s260 = smul.addr %s259, 2
        %s261 = scalar_lea.vmem [#allocation8], %s260
        %s262 = smul.u32 8, %s31
        %s263 = smul.u32 8, %s31
        %v265 = vld [vmem:[%s228] sm:$0xf]
        %v266 = vld [vmem:[%s228 + $0x4] sm:$0xf]
        %v267 = vld [vmem:[%s228 + $0x8] sm:$0xf]
        %v268 = vld [vmem:[%s228 + $0xc] sm:$0xf]
        %v269 = vld [vmem:[%s228 + $0x10] sm:$0xf]
        %v270 = vld [vmem:[%s228 + $0x14] sm:$0xf]
        %v271 = vld [vmem:[%s228 + $0x18] sm:$0xf]
        %v272 = vld [vmem:[%s228 + $0x1c] sm:$0xf]
        %v273 = vld [vmem:[#allocation5] sm:$0xf]
        %v274 = vld [vmem:[#allocation5 + $0x4] sm:$0xf]
        %v275 = vld [vmem:[#allocation5 + $0x8] sm:$0xf]
        %v276 = vld [vmem:[#allocation5 + $0xc] sm:$0xf]
        %v277 = vld [vmem:[#allocation5 + $0x10] sm:$0xf]
        %v278 = vld [vmem:[#allocation5 + $0x14] sm:$0xf]
        %v279 = vld [vmem:[#allocation5 + $0x18] sm:$0xf]
        %v280 = vld [vmem:[#allocation5 + $0x1c] sm:$0xf]
        %v281 = vld [vmem:[#allocation5 + $0x20] sm:$0xf]
        %v282 = vld [vmem:[#allocation5 + $0x24] sm:$0xf]
        %v283 = vld [vmem:[#allocation5 + $0x28] sm:$0xf]
        %v284 = vld [vmem:[#allocation5 + $0x2c] sm:$0xf]
        %v285 = vld [vmem:[#allocation5 + $0x30] sm:$0xf]
        %v286 = vld [vmem:[#allocation5 + $0x34] sm:$0xf]
        %v287 = vld [vmem:[#allocation5 + $0x38] sm:$0xf]
        %v288 = vld [vmem:[#allocation5 + $0x3c] sm:$0xf]
        %v289 = vld [vmem:[%s2] sm:$0x1]
        %v291 = vlaneseq
        %v292 = vshrl.u32 %v291, 7
        %v293 = vsub.s32 0, %v292
        %v294 = vrot.slane %v289, %v293
        %v304 = vunpack.c.l.b16 %v265
        %v305 = vunpack.c.l.b16 %v266
        %v306 = vunpack.c.l.b16 %v267
        %v307 = vunpack.c.l.b16 %v268
        %v308 = vunpack.c.l.b16 %v269
        %v309 = vunpack.c.l.b16 %v270
        %v310 = vunpack.c.l.b16 %v271
        %v311 = vunpack.c.l.b16 %v272
        %v312 = vpack.c.b16 %v305, %v304
        %v313 = vpack.c.b16 %v307, %v306
        %v314 = vpack.c.b16 %v309, %v308
        %v315 = vpack.c.b16 %v311, %v310
        %v336 = vunpack.c.l.b16 %v273
        %v337 = vunpack.c.l.b16 %v274
        %v338 = vunpack.c.l.b16 %v275
        %v339 = vunpack.c.l.b16 %v276
        %v340 = vunpack.c.l.b16 %v277
        %v341 = vunpack.c.l.b16 %v278
        %v342 = vunpack.c.l.b16 %v279
        %v343 = vunpack.c.l.b16 %v280
        %v344 = vunpack.c.l.b16 %v281
        %v345 = vunpack.c.l.b16 %v282
        %v346 = vunpack.c.l.b16 %v283
        %v347 = vunpack.c.l.b16 %v284
        %v348 = vunpack.c.l.b16 %v285
        %v349 = vunpack.c.l.b16 %v286
        %v350 = vunpack.c.l.b16 %v287
        %v351 = vunpack.c.l.b16 %v288
        %v352 = vpack.c.b16 %v337, %v336
        %v353 = vpack.c.b16 %v339, %v338
        %v354 = vpack.c.b16 %v341, %v340
        %v355 = vpack.c.b16 %v343, %v342
        %v356 = vpack.c.b16 %v345, %v344
        %v357 = vpack.c.b16 %v347, %v346
        %v358 = vpack.c.b16 %v349, %v348
        %v359 = vpack.c.b16 %v351, %v350
        %368 = vmatprep.subr.bf16.mxu0 0
        %369 = vmatpush1.bf16.msra.mxu0 %v352
        %370 = vmatprep.subr.bf16.mxu0 0
        %371 = vmatpush1.bf16.msra.mxu0 %v353
        %372 = vmatprep.subr.bf16.mxu0 0
        %373 = vmatpush1.bf16.msra.mxu0 %v354
        %374 = vmatprep.subr.bf16.mxu0 0
        %375 = vmatpush1.bf16.msra.mxu0 %v355
        %376 = vmatprep.subr.bf16.mxu0 0
        %377 = vmatpush1.bf16.msra.mxu0 %v356
        %378 = vmatprep.subr.bf16.mxu0 0
        %379 = vmatpush1.bf16.msra.mxu0 %v357
        %380 = vmatprep.subr.bf16.mxu0 0
        %381 = vmatpush1.bf16.msra.mxu0 %v358
        %382 = vmatprep.subr.bf16.mxu0 0
        %383 = vmatpush1.bf16.msra.mxu0 %v359
        %384 = vmatprep.subr.bf16.mxu0 0
        %385 = vmatpush1.bf16.msra.mxu0 0
        %386 = vmatprep.subr.bf16.mxu0 0
        %387 = vmatpush1.bf16.msra.mxu0 0
        %388 = vmatprep.subr.bf16.mxu0 0
        %389 = vmatpush1.bf16.msra.mxu0 0
        %390 = vmatprep.subr.bf16.mxu0 0
        %391 = vmatpush1.bf16.msra.mxu0 0
        %392 = vmatprep.subr.bf16.mxu0 0
        %393 = vmatpush1.bf16.msra.mxu0 0
        %394 = vmatprep.subr.bf16.mxu0 0
        %395 = vmatpush1.bf16.msra.mxu0 0
        %396 = vmatprep.subr.bf16.mxu0 0
        %397 = vmatpush1.bf16.msra.mxu0 0
        %398 = vmatprep.subr.bf16.mxu0 0
        %399 = vmatpush1.bf16.msra.mxu0 0
        %400 = vmatprep.mubr.bf16.mxu0 0
        %401 = vmatmul.mubr.bf16.gmra.mrb[0].mxu0 %v312
        %v402 = vpop.f32.mrb[0].mxu0
        %v403 = vadd.f32 %v294, %v402
        %v404 = vpop.f32.mrb[0].mxu0
        %v405 = vpop.f32.mrb[0].mxu0
        %v406 = vadd.f32 %v294, %v405
        %v407 = vpop.f32.mrb[0].mxu0
        %408 = vmatprep.mubr.bf16.mxu0 0
        %409 = vmatmul.mubr.bf16.gmra.mrb[0].mxu0 %v313
        %v410 = vpop.f32.mrb[0].mxu0
        %v411 = vadd.f32 %v294, %v410
        %v412 = vpop.f32.mrb[0].mxu0
        %v413 = vpop.f32.mrb[0].mxu0
        %v414 = vadd.f32 %v294, %v413
        %v415 = vpop.f32.mrb[0].mxu0
        %416 = vmatprep.mubr.bf16.mxu0 0
        %417 = vmatmul.mubr.bf16.gmra.mrb[0].mxu0 %v314
        %v418 = vpop.f32.mrb[0].mxu0
        %v419 = vadd.f32 %v294, %v418
        %v420 = vpop.f32.mrb[0].mxu0
        %v421 = vpop.f32.mrb[0].mxu0
        %v422 = vadd.f32 %v294, %v421
        %v423 = vpop.f32.mrb[0].mxu0
        %424 = vmatprep.mubr.bf16.mxu0 0
        %425 = vmatmul.mubr.bf16.gmra.mrb[0].mxu0 %v315
        %v426 = vpop.f32.mrb[0].mxu0
        %v427 = vadd.f32 %v294, %v426
        %v428 = vpop.f32.mrb[0].mxu0
        %v429 = vpop.f32.mrb[0].mxu0
        %v430 = vadd.f32 %v294, %v429
        %v431 = vpop.f32.mrb[0].mxu0
        %432 = vdwg.mxu0
        %v433 = vpack.c.bf16 %v406, %v403
        %v434 = vpack.c.bf16 %v414, %v411
        %v435 = vpack.c.bf16 %v422, %v419
        %v436 = vpack.c.bf16 %v430, %v427
        %v441 = vunpack.c.l.b16 %v433
        %v442 = vunpack.c.h.b16 %v433
        %v443 = vunpack.c.l.b16 %v434
        %v444 = vunpack.c.h.b16 %v434
        %v445 = vunpack.c.l.b16 %v435
        %v446 = vunpack.c.h.b16 %v435
        %v447 = vunpack.c.l.b16 %v436
        %v448 = vunpack.c.h.b16 %v436
        %v449 = vpack.c.b16 %v441, %v441
        %v450 = vpack.c.b16 %v442, %v442
        %v451 = vpack.c.b16 %v443, %v443
        %v452 = vpack.c.b16 %v444, %v444
        %v453 = vpack.c.b16 %v445, %v445
        %v454 = vpack.c.b16 %v446, %v446
        %v455 = vpack.c.b16 %v447, %v447
        %v456 = vpack.c.b16 %v448, %v448
        %465 = vst [vmem:[%s254] sm:$0xf] %v449
        %466 = vst [vmem:[%s254 + $0x4] sm:$0xf] %v450
        %467 = vst [vmem:[%s254 + $0x8] sm:$0xf] %v451
        %468 = vst [vmem:[%s254 + $0xc] sm:$0xf] %v452
        %469 = vst [vmem:[%s254 + $0x10] sm:$0xf] %v453
        %470 = vst [vmem:[%s254 + $0x14] sm:$0xf] %v454
        %471 = vst [vmem:[%s254 + $0x18] sm:$0xf] %v455
        %472 = vst [vmem:[%s254 + $0x1c] sm:$0xf] %v456
        %v473 = vadd.f32 %v403, %v406
        %v474 = vadd.f32 %v473, %v411
        %v475 = vadd.f32 %v474, %v414
        %v476 = vadd.f32 %v475, %v419
        %v477 = vadd.f32 %v476, %v422
        %v478 = vadd.f32 %v477, %v427
        %v479 = vadd.f32 %v478, %v430
        %v480 = vrot.slane %v479, 4
        %v481 = vadd.f32 %v479, %v480
        %v482 = vrot.slane %v481, 2
        %v483 = vadd.f32 %v481, %v482
        %v484 = vrot.slane %v483, 1
        %v485 = vadd.f32 %v483, %v484
        %v486 = vmul.f32 %v403, %v403
        %v487 = vmul.f32 %v406, %v406
        %v488 = vmul.f32 %v411, %v411
        %v489 = vmul.f32 %v414, %v414
        %v490 = vmul.f32 %v419, %v419
        %v491 = vmul.f32 %v422, %v422
        %v492 = vmul.f32 %v427, %v427
        %v493 = vmul.f32 %v430, %v430
        %v494 = vadd.f32 %v486, %v487
        %v495 = vadd.f32 %v494, %v488
        %v496 = vadd.f32 %v495, %v489
        %v497 = vadd.f32 %v496, %v490
        %v498 = vadd.f32 %v497, %v491
        %v499 = vadd.f32 %v498, %v492
        %v500 = vadd.f32 %v499, %v493
        %v501 = vrot.slane %v500, 4
        %v502 = vadd.f32 %v500, %v501
        %v503 = vrot.slane %v502, 2
        %v504 = vadd.f32 %v502, %v503
        %v505 = vrot.slane %v504, 1
        %v506 = vadd.f32 %v504, %v505
        %vm507 = vcmask 1040384
        %v508 = vsel %vm507, %v485, %v506
        %509 = vst [vmem:[%s261] sm:$0x3] %v508
        %s510 = sand.u32 %s118, 1
        %s511 = scalar_lea.sflag [#allocation4], %s510
        %s512 = sand.u32 %s118, 1
        %s513 = smul.addr %s512, 32
        %s514 = scalar_lea.vmem [#allocation7], %s513
        %s515 = sand.u32 %s146, 1
        %s516 = scalar_lea.sflag [#allocation9], %s515
        %s517 = sand.u32 %s146, 1
        %s518 = smul.addr %s517, 2
        %s519 = scalar_lea.vmem [#allocation8], %s518
        // Predicated region
        $region41: #{tpu_custom_call.1} parent=31 // pred_check
          %p520 = pneg %p128
        $region42: #{tpu_custom_call.1} parent=31 // pred_check_branch
          %522 = sbr.rel (%p520) target = $region44
        $region43: #{tpu_custom_call.1} parent=31 // pred_region
          %s523 = smul.u32 8, %s31
          %s525 = ssub.s32 512, 512
          %526 = vsyncadd %s511, %s525
          %s527 = smul.addr %s30, 8
          %s528 = sadd.s32 %s523, %s527
          %s529 = smul.addr %s528, 64
          %s530 = scalar_lea.hbm %s3, %s529
          %s531 = sshll.u32 %s514, 4
          %s532 = int_to_ptr.vmem [resolvable:$true] %s531
          %537 = dma.vmem_to_hbm [thread:$0]  %s532, 512, %s530, %s511, 64, 64, 4
        $region44: #{tpu_custom_call.1} parent=31 // pred_fallthru
          _
        // Predicated region
        $region45: #{tpu_custom_call.1} parent=31 // pred_check
          %p538 = pneg %p156
        $region46: #{tpu_custom_call.1} parent=31 // pred_check_branch
          %540 = sbr.rel (%p538) target = $region48
        $region47: #{tpu_custom_call.1} parent=31 // pred_region
          %s542 = ssub.s32 32, 32
          %543 = vsyncadd %s516, %s542
          %s544 = sadd.s32 %s31, %s30
          %s545 = smul.addr %s544, 32
          %s546 = scalar_lea.hbm %s4, %s545
          %s548 = sshll.u32 %s519, 4
          %s549 = int_to_ptr.vmem [resolvable:$true] %s548
          %551 = dma.vmem_to_hbm [thread:$0]  %s549, 32, %s546, %s516
        $region48: #{tpu_custom_call.1} parent=31 // pred_fallthru
          _
      $region32: #{tpu_custom_call.1} parent=5 // pred_fallthru
        _
      %p552 = scmp.le.s32.totalorder 2, %s21
      // Predicated region
      $region49: #{tpu_custom_call.1} parent=5 // pred_check
        %p553 = pneg %p552
      $region50: #{tpu_custom_call.1} parent=5 // pred_check_branch
        %555 = sbr.rel (%p553) target = $region52
      $region51: #{tpu_custom_call.1} parent=5 // pred_region
        %s556 = ssub.s32 %s21, 2
        // Predicated region
        $region53: #{tpu_custom_call.1} parent=51 // pred_check
          %p557 = pneg %p134
        $region54: #{tpu_custom_call.1} parent=51 // pred_check_branch
          %559 = sbr.rel (%p557) target = $region56
        $region55: #{tpu_custom_call.1} parent=51 // pred_region
          %s560 = sand.u32 %s119, 1
          %s561 = scalar_lea.sflag [#allocation4], %s560
          %s562 = sand.u32 %s119, 1
          %s563 = smul.addr %s562, 32
          %s564 = scalar_lea.vmem [#allocation7], %s563
          %565 = dma.done %s561, 512
        $region56: #{tpu_custom_call.1} parent=51 // pred_fallthru
          _
        // Predicated region
        $region57: #{tpu_custom_call.1} parent=51 // pred_check
          %p566 = pneg %p162
        $region58: #{tpu_custom_call.1} parent=51 // pred_check_branch
          %568 = sbr.rel (%p566) target = $region60
        $region59: #{tpu_custom_call.1} parent=51 // pred_region
          %s569 = sand.u32 %s147, 1
          %s570 = scalar_lea.sflag [#allocation9], %s569
          %s571 = sand.u32 %s147, 1
          %s572 = smul.addr %s571, 2
          %s573 = scalar_lea.vmem [#allocation8], %s572
          %574 = dma.done %s570, 32
        $region60: #{tpu_custom_call.1} parent=51 // pred_fallthru
          _
      $region52: #{tpu_custom_call.1} parent=5 // pred_fallthru
        _
    $region6: #{tpu_custom_call.1} parent=1 // loop_footer
      %s25 = sadd.s32 1, %s21
    $region7: #{tpu_custom_call.1} parent=1 // loop_footer_branch
      %20 = sbr.rel target = $region3
    $region8: #{tpu_custom_call.1} parent=1 // loop_exit
      _
    %575 = vsyncpa [#allocation3], 1
    %s576 = scalar_lea.sflag [#allocation3], 1
    %577 = vsyncpa %s576, 1
    %578 = vsyncpa [#allocation6], 1
    %579 = vsyncpa [#allocation4], 1
    %s580 = scalar_lea.sflag [#allocation4], 1
    %581 = vsyncpa %s580, 1
    %582 = vsyncpa [#allocation9], 1
    %s583 = scalar_lea.sflag [#allocation9], 1
    %584 = vsyncpa %s583, 1

</llo_original>
